<compile_context>
chip_gen: v5e
topology: v5e:2x2
jax: 0.10.0
libtpu: 0.0.40
codegen_flags: <defaults>
</compile_context>

<pallas_src>
import functools

import numpy as np
import jax
import jax.numpy as jnp
from jax import lax
from jax.experimental import pallas as pl
from jax.experimental.pallas import tpu as pltpu

# ----------------------------- model sizes -----------------------------------
VOCAB = 64          # vocab_size
EMBED = 32          # embed_size
NUM_CLASSES = 5     # num_classes (real)
C_PAD = 128         # classes padded to the lane width
NR = 8              # reachable transition rows, rounded up to a sublane tile
PAR_ROWS = 16       # packed-parameter tensor rows (trans[0:8], start, end, pad)
B, T = 2, 8         # batch, sequence length
NEG = -1e9          # "minus infinity" for padded classes (finite to avoid NaNs)

HIGHEST = lax.Precision.HIGHEST


# ------------------- fused kernel: emissions + CRF NLL ------------------------
def fused_crf_kernel(xt_ref, tproj_ref, par_ref, out_ref, *, nr, bsz, t_len):
    """Single invocation computing sum_b (logZ_b - gold_score_b).

    xt_ref:    (T*B, 2) int32, time-major rows (row = t*B + b);
               column 0 = token id, column 1 = gold tag.
    tproj_ref: (V, C_PAD) embedding table already projected by fc weight,
               with the fc bias folded in (padded classes = -1e9).
    par_ref:   (16, C_PAD) packed small params: rows 0..nr-1 = transition rows
               (padded entries = -1e9), row nr = start, row nr+1 = end.
    out_ref:   (1, 1) total negative log-likelihood (sum over batch).
    """
    tb = xt_ref.shape[0]
    v = tproj_ref.shape[0]
    c = tproj_ref.shape[1]

    xt = xt_ref[...]                      # (TB, 2) int32
    tok = xt[:, 0:1]                      # (TB, 1)
    tgs = xt[:, 1:2]                      # (TB, 1)
    tproj = tproj_ref[...]                # (V, C)
    par = par_ref[...]                    # (16, C)
    trans_r = par[0:nr, :]                # (8, C)  reachable transition rows
    start = par[nr:nr + 1, :]             # (1, C)
    end = par[nr + 1:nr + 2, :]           # (1, C)

    # ---------------- emissions: one-hot lookup fused with fc -----------------
    # bias is already folded into tproj (one-hot rows sum to 1, so this is exact)
    iota_v = lax.broadcasted_iota(jnp.int32, (tb, v), 1)
    onehot = (tok == iota_v).astype(jnp.float32)                        # (TB, V)
    emis = jnp.dot(onehot, tproj, preferred_element_type=jnp.float32,
                   precision=HIGHEST)                                   # (TB, C)

    msk = (tok != 0).astype(jnp.float32)                                # (TB, 1)
    iota_c = lax.broadcasted_iota(jnp.int32, (tb, c), 1)
    oh = (tgs == iota_c).astype(jnp.float32)                            # (TB, C)

    # ---------------- gold path score (whole batch at once) -------------------
    emit_score = jnp.sum(jnp.sum(emis * oh, axis=1, keepdims=True) * msk,
                         axis=0, keepdims=True)                         # (1, 1)

    start_score = jnp.sum(jnp.sum(oh[0:bsz, :] * start, axis=1, keepdims=True),
                          axis=0, keepdims=True)                        # (1, 1)

    # trans[tag_{t-1}, tag_t]: K-sliced to the 8 reachable classes (tags < 5),
    # DEFAULT precision is exact-enough (one-hot LHS is exact in bf16).
    proj = jnp.dot(oh[:, 0:nr], trans_r,
                   preferred_element_type=jnp.float32)                  # (TB, C)
    per_row = jnp.sum(proj[:-bsz, :] * oh[bsz:, :], axis=1, keepdims=True)
    trans_score = jnp.sum(per_row * msk[bsz:, :], axis=0, keepdims=True)

    # end transition at the last valid position (trailing padding only, mask[0]=1)
    dot_e = jnp.sum(oh * end, axis=1, keepdims=True)                    # (TB, 1)
    end_score = (jnp.sum(msk * dot_e, axis=0, keepdims=True)
                 - jnp.sum(msk[bsz:, :] * dot_e[:-bsz, :], axis=0, keepdims=True))

    gold = emit_score + start_score + trans_score + end_score           # (1, 1)

    # ---------------- log partition (forward algorithm, batched over B) -------
    # Doubly-stabilised: exp(alpha - m) <= 1 and exp(trans - tmax) <= 1, so no
    # overflow for any parameter magnitude. Padded entries underflow to exactly
    # 0 (trans_r padded = -1e9, padded alphas <= -2e9 / -inf).
    tmax = jnp.max(jnp.max(trans_r, axis=1, keepdims=True),
                   axis=0, keepdims=True)                               # (1, 1)
    et = jnp.exp(trans_r - tmax)                                        # (8, C)

    alpha = start + emis[0:bsz, :]                                      # (B, C)
    for t in range(1, t_len):   # T=8: keep Python-unrolled for LLO visibility
        em_t = emis[t * bsz:(t + 1) * bsz, :]                           # (B, C)
        msk_t = msk[t * bsz:(t + 1) * bsz, :]                           # (B, 1)
        m = jnp.max(alpha, axis=1, keepdims=True)                       # (B, 1)
        ea = jnp.exp(alpha - m)                                         # (B, C)
        s = jnp.dot(ea[:, 0:nr], et,
                    preferred_element_type=jnp.float32)                 # (B, C)
        nxt = m + tmax + jnp.log(s) + em_t   # padded cols: log(0) = -inf, safe
        alpha = jnp.where(msk_t > 0, nxt, alpha)

    ae = alpha + end
    mf = jnp.max(ae, axis=1, keepdims=True)
    logz_rows = mf + jnp.log(jnp.sum(jnp.exp(ae - mf), axis=1, keepdims=True))
    logz = jnp.sum(logz_rows, axis=0, keepdims=True)                    # (1, 1)

    out_ref[...] = logz - gold


# ----------------------------- wrapper ----------------------------------------
def make_crf_model(params):
    table_proj, par_pack = params

    def loss_fn(x, tags):
        b, t_len = x.shape
        tb = b * t_len
        # time-major flattening (row = t*B + b), x/tags packed into one tensor
        xt = jnp.concatenate([x.T.reshape(tb, 1), tags.T.reshape(tb, 1)],
                             axis=1).astype(jnp.int32)                  # (TB, 2)

        out = pl.pallas_call(
            functools.partial(fused_crf_kernel, nr=NR, bsz=b, t_len=t_len),
            out_shape=jax.ShapeDtypeStruct((1, 1), jnp.float32),
            # no grid: single invocation, whole (tiny) operands resident in VMEM
            in_specs=[
                pl.BlockSpec(memory_space=pltpu.MemorySpace.VMEM),
                pl.BlockSpec(memory_space=pltpu.MemorySpace.VMEM),
                pl.BlockSpec(memory_space=pltpu.MemorySpace.VMEM),
            ],
            out_specs=pl.BlockSpec(memory_space=pltpu.MemorySpace.VMEM),
        )(xt, table_proj, par_pack)

        return out[0, 0]                  # == -CRF(...) with reduction='sum'

    return jax.jit(loss_fn)


# --------------------------- pure-JAX reference --------------------------------
def reference_loss(x, tags, embed, w, b_, trans, start, end):
    emis = jnp.einsum("bte,ec->btc", embed[x], w, precision="highest") + b_
    mask = (x != 0).astype(jnp.float32)
    bsz, t_len, _ = emis.shape
    total = jnp.float32(0.0)
    for bi in range(bsz):
        em, tg, mk = emis[bi], tags[bi], mask[bi]
        score = start[tg[0]] + em[0, tg[0]]
        alpha = start + em[0]
        last_tag = tg[0]
        for t in range(1, t_len):
            score = score + mk[t] * (trans[tg[t - 1], tg[t]] + em[t, tg[t]])
            nxt = jax.scipy.special.logsumexp(
                alpha[:, None] + trans + em[t][None, :], axis=0)
            alpha = jnp.where(mk[t] > 0, nxt, alpha)
            last_tag = jnp.where(mk[t] > 0, tg[t], last_tag)
        score = score + end[last_tag]
        log_z = jax.scipy.special.logsumexp(alpha + end)
        total = total + (log_z - score)
    return total


# ------------------------------- main ------------------------------------------
if __name__ == "__main__":
    key = jax.random.PRNGKey(0)
    ks = jax.random.split(key, 8)

    # deterministic parameter init (same shapes as the PyTorch module's __init__)
    embed = jax.random.normal(ks[0], (VOCAB, EMBED), jnp.float32)          # nn.Embedding
    lim = 1.0 / float(np.sqrt(EMBED))
    w = jax.random.uniform(ks[1], (EMBED, NUM_CLASSES), jnp.float32, -lim, lim)   # nn.Linear weight^T
    b_ = jax.random.uniform(ks[2], (NUM_CLASSES,), jnp.float32, -lim, lim)         # nn.Linear bias
    trans = jax.random.uniform(ks[3], (NUM_CLASSES, NUM_CLASSES), jnp.float32, -0.1, 0.1)
    start = jax.random.uniform(ks[4], (NUM_CLASSES,), jnp.float32, -0.1, 0.1)
    end = jax.random.uniform(ks[5], (NUM_CLASSES,), jnp.float32, -0.1, 0.1)

    # fold the Linear layer (weight AND bias) into the embedding table; padded
    # classes are forced to -1e9 so they never contribute.
    w_pad = jnp.zeros((EMBED, C_PAD), jnp.float32).at[:, :NUM_CLASSES].set(w)
    b_pad = jnp.full((1, C_PAD), NEG, jnp.float32).at[0, :NUM_CLASSES].set(b_)
    table_proj = jnp.dot(embed, w_pad, precision=HIGHEST) + b_pad          # (V, C_PAD)

    # one packed small-parameter tensor: rows 0..NR-1 = reachable transition
    # rows, row NR = start, row NR+1 = end, remaining rows = padding.
    par_pack = jnp.full((PAR_ROWS, C_PAD), NEG, jnp.float32)
    par_pack = par_pack.at[:NUM_CLASSES, :NUM_CLASSES].set(trans)
    par_pack = par_pack.at[NR, :NUM_CLASSES].set(start)
    par_pack = par_pack.at[NR + 1, :NUM_CLASSES].set(end)

    # inputs: token 0 is padding (mask = x != 0); trailing padding only
    x = jax.random.randint(ks[6], (B, T), 1, VOCAB, dtype=jnp.int32)
    x = x.at[1, 5:].set(0)                      # second sequence has length 5
    tags = jax.random.randint(ks[7], (B, T), 0, NUM_CLASSES, dtype=jnp.int32)
    tags = tags.at[1, 5:].set(0)

    # same assumption as torchcrf: the first timestep of every sequence is valid
    assert bool(jnp.all(x[:, 0] != 0)), "CRF requires mask[:, 0] to be all True"

    loss_fn = make_crf_model((table_proj, par_pack))
    loss = jax.block_until_ready(loss_fn(x, tags))

    ref = reference_loss(x, tags, embed, w, b_, trans, start, end)
    np.testing.assert_allclose(np.asarray(loss), np.asarray(ref), rtol=2e-2, atol=2e-2)

    print("KERNEL_OK")
</pallas_src>

<mosaic_0001>
module attributes {stable_mosaic.version = 11 : i64} {
  func.func @fused_crf_kernel(%arg0: memref<16x2xi32, #tpu.memory_space<vmem>>, %arg1: memref<64x128xf32, #tpu.memory_space<vmem>>, %arg2: memref<16x128xf32, #tpu.memory_space<vmem>>, %arg3: memref<1x1xf32, #tpu.memory_space<vmem>>) attributes {dimension_semantics = [], scalar_prefetch = 0 : i64, scratch_operands = 0 : i64, tpu.core_type = #tpu.core_type<tc>} {
    %c0 = arith.constant 0 : index
    %c0_0 = arith.constant 0 : index
    %0 = vector.load %arg0[%c0, %c0_0] : memref<16x2xi32, #tpu.memory_space<vmem>>, vector<16x2xi32>
    %1 = vector.extract_strided_slice %0 {offsets = [0, 0], sizes = [16, 1], strides = [1, 1]} : vector<16x2xi32> to vector<16x1xi32>
    %2 = vector.extract_strided_slice %0 {offsets = [0, 1], sizes = [16, 1], strides = [1, 1]} : vector<16x2xi32> to vector<16x1xi32>
    %c0_1 = arith.constant 0 : index
    %c0_2 = arith.constant 0 : index
    %3 = vector.load %arg1[%c0_1, %c0_2] : memref<64x128xf32, #tpu.memory_space<vmem>>, vector<64x128xf32>
    %c0_3 = arith.constant 0 : index
    %c0_4 = arith.constant 0 : index
    %4 = vector.load %arg2[%c0_3, %c0_4] : memref<16x128xf32, #tpu.memory_space<vmem>>, vector<16x128xf32>
    %5 = vector.extract_strided_slice %4 {offsets = [0, 0], sizes = [8, 128], strides = [1, 1]} : vector<16x128xf32> to vector<8x128xf32>
    %6 = vector.extract_strided_slice %4 {offsets = [8, 0], sizes = [1, 128], strides = [1, 1]} : vector<16x128xf32> to vector<1x128xf32>
    %7 = vector.extract_strided_slice %4 {offsets = [9, 0], sizes = [1, 128], strides = [1, 1]} : vector<16x128xf32> to vector<1x128xf32>
    %8 = tpu.iota {dimensions = array<i32: 1>} : vector<16x64xi32>
    %9 = vector.broadcast %1 : vector<16x1xi32> to vector<16x64xi32>
    %10 = arith.cmpi eq, %9, %8 : vector<16x64xi32>
    %11 = arith.extui %10 : vector<16x64xi1> to vector<16x64xi32>
    %12 = arith.sitofp %11 : vector<16x64xi32> to vector<16x64xf32>
    %cst = arith.constant dense<0.000000e+00> : vector<16x128xf32>
    %13 = tpu.matmul %12, %3, %cst {dimension_numbers = #tpu.dot_dimension_numbers<[1], [0], [0], [1], [0, 0, 1, 1], [], []>, precision = #tpu.contract_precision<fp32>} : vector<16x64xf32>, vector<64x128xf32>, vector<16x128xf32> -> vector<16x128xf32>
    %c0_i32 = arith.constant 0 : i32
    %14 = vector.broadcast %c0_i32 : i32 to vector<16x1xi32>
    %15 = arith.cmpi ne, %1, %14 : vector<16x1xi32>
    %16 = arith.extui %15 : vector<16x1xi1> to vector<16x1xi32>
    %17 = arith.sitofp %16 : vector<16x1xi32> to vector<16x1xf32>
    %18 = tpu.iota {dimensions = array<i32: 1>} : vector<16x128xi32>
    %19 = vector.broadcast %2 : vector<16x1xi32> to vector<16x128xi32>
    %20 = arith.cmpi eq, %19, %18 : vector<16x128xi32>
    %21 = arith.extui %20 : vector<16x128xi1> to vector<16x128xi32>
    %22 = arith.sitofp %21 : vector<16x128xi32> to vector<16x128xf32>
    %23 = arith.mulf %13, %22 : vector<16x128xf32>
    %cst_5 = arith.constant dense<0.000000e+00> : vector<16xf32>
    %24 = vector.multi_reduction <add>, %23, %cst_5 [1] : vector<16x128xf32> to vector<16xf32>
    %25 = vector.shape_cast %24 : vector<16xf32> to vector<16x1xf32>
    %26 = arith.mulf %25, %17 : vector<16x1xf32>
    %cst_6 = arith.constant dense<0.000000e+00> : vector<1xf32>
    %27 = vector.multi_reduction <add>, %26, %cst_6 [0] : vector<16x1xf32> to vector<1xf32>
    %28 = vector.shape_cast %27 : vector<1xf32> to vector<1x1xf32>
    %29 = vector.extract_strided_slice %22 {offsets = [0, 0], sizes = [2, 128], strides = [1, 1]} : vector<16x128xf32> to vector<2x128xf32>
    %30 = vector.broadcast %6 : vector<1x128xf32> to vector<2x128xf32>
    %31 = arith.mulf %29, %30 : vector<2x128xf32>
    %cst_7 = arith.constant dense<0.000000e+00> : vector<2xf32>
    %32 = vector.multi_reduction <add>, %31, %cst_7 [1] : vector<2x128xf32> to vector<2xf32>
    %33 = vector.shape_cast %32 : vector<2xf32> to vector<2x1xf32>
    %cst_8 = arith.constant dense<0.000000e+00> : vector<1xf32>
    %34 = vector.multi_reduction <add>, %33, %cst_8 [0] : vector<2x1xf32> to vector<1xf32>
    %35 = vector.shape_cast %34 : vector<1xf32> to vector<1x1xf32>
    %36 = vector.extract_strided_slice %22 {offsets = [0, 0], sizes = [16, 8], strides = [1, 1]} : vector<16x128xf32> to vector<16x8xf32>
    %cst_9 = arith.constant dense<0.000000e+00> : vector<16x128xf32>
    %37 = tpu.matmul %36, %5, %cst_9 {dimension_numbers = #tpu.dot_dimension_numbers<[1], [0], [0], [1], [0, 0, 1, 1], [], []>} : vector<16x8xf32>, vector<8x128xf32>, vector<16x128xf32> -> vector<16x128xf32>
    %38 = vector.extract_strided_slice %37 {offsets = [0, 0], sizes = [14, 128], strides = [1, 1]} : vector<16x128xf32> to vector<14x128xf32>
    %39 = vector.extract_strided_slice %22 {offsets = [2, 0], sizes = [14, 128], strides = [1, 1]} : vector<16x128xf32> to vector<14x128xf32>
    %40 = arith.mulf %38, %39 : vector<14x128xf32>
    %cst_10 = arith.constant dense<0.000000e+00> : vector<14xf32>
    %41 = vector.multi_reduction <add>, %40, %cst_10 [1] : vector<14x128xf32> to vector<14xf32>
    %42 = vector.shape_cast %41 : vector<14xf32> to vector<14x1xf32>
    %43 = vector.extract_strided_slice %17 {offsets = [2, 0], sizes = [14, 1], strides = [1, 1]} : vector<16x1xf32> to vector<14x1xf32>
    %44 = arith.mulf %42, %43 : vector<14x1xf32>
    %cst_11 = arith.constant dense<0.000000e+00> : vector<1xf32>
    %45 = vector.multi_reduction <add>, %44, %cst_11 [0] : vector<14x1xf32> to vector<1xf32>
    %46 = vector.shape_cast %45 : vector<1xf32> to vector<1x1xf32>
    %47 = vector.broadcast %7 : vector<1x128xf32> to vector<16x128xf32>
    %48 = arith.mulf %22, %47 : vector<16x128xf32>
    %cst_12 = arith.constant dense<0.000000e+00> : vector<16xf32>
    %49 = vector.multi_reduction <add>, %48, %cst_12 [1] : vector<16x128xf32> to vector<16xf32>
    %50 = vector.shape_cast %49 : vector<16xf32> to vector<16x1xf32>
    %51 = arith.mulf %17, %50 : vector<16x1xf32>
    %cst_13 = arith.constant dense<0.000000e+00> : vector<1xf32>
    %52 = vector.multi_reduction <add>, %51, %cst_13 [0] : vector<16x1xf32> to vector<1xf32>
    %53 = vector.shape_cast %52 : vector<1xf32> to vector<1x1xf32>
    %54 = vector.extract_strided_slice %17 {offsets = [2, 0], sizes = [14, 1], strides = [1, 1]} : vector<16x1xf32> to vector<14x1xf32>
    %55 = vector.extract_strided_slice %50 {offsets = [0, 0], sizes = [14, 1], strides = [1, 1]} : vector<16x1xf32> to vector<14x1xf32>
    %56 = arith.mulf %54, %55 : vector<14x1xf32>
    %cst_14 = arith.constant dense<0.000000e+00> : vector<1xf32>
    %57 = vector.multi_reduction <add>, %56, %cst_14 [0] : vector<14x1xf32> to vector<1xf32>
    %58 = vector.shape_cast %57 : vector<1xf32> to vector<1x1xf32>
    %59 = arith.subf %53, %58 : vector<1x1xf32>
    %60 = arith.addf %28, %35 : vector<1x1xf32>
    %61 = arith.addf %60, %46 : vector<1x1xf32>
    %62 = arith.addf %61, %59 : vector<1x1xf32>
    %cst_15 = arith.constant dense<0xFF800000> : vector<8xf32>
    %63 = vector.multi_reduction <maximumf>, %5, %cst_15 [1] : vector<8x128xf32> to vector<8xf32>
    %64 = vector.shape_cast %63 : vector<8xf32> to vector<8x1xf32>
    %cst_16 = arith.constant dense<0xFF800000> : vector<1xf32>
    %65 = vector.multi_reduction <maximumf>, %64, %cst_16 [0] : vector<8x1xf32> to vector<1xf32>
    %66 = vector.shape_cast %65 : vector<1xf32> to vector<1x1xf32>
    %67 = vector.broadcast %66 : vector<1x1xf32> to vector<8x128xf32>
    %68 = arith.subf %5, %67 : vector<8x128xf32>
    %69 = math.exp %68 : vector<8x128xf32>
    %70 = vector.extract_strided_slice %13 {offsets = [0, 0], sizes = [2, 128], strides = [1, 1]} : vector<16x128xf32> to vector<2x128xf32>
    %71 = vector.broadcast %6 : vector<1x128xf32> to vector<2x128xf32>
    %72 = arith.addf %71, %70 : vector<2x128xf32>
    %73 = vector.extract_strided_slice %13 {offsets = [2, 0], sizes = [2, 128], strides = [1, 1]} : vector<16x128xf32> to vector<2x128xf32>
    %74 = vector.extract_strided_slice %17 {offsets = [2, 0], sizes = [2, 1], strides = [1, 1]} : vector<16x1xf32> to vector<2x1xf32>
    %cst_17 = arith.constant dense<0xFF800000> : vector<2xf32>
    %75 = vector.multi_reduction <maximumf>, %72, %cst_17 [1] : vector<2x128xf32> to vector<2xf32>
    %76 = vector.shape_cast %75 : vector<2xf32> to vector<2x1xf32>
    %77 = vector.broadcast %76 : vector<2x1xf32> to vector<2x128xf32>
    %78 = arith.subf %72, %77 : vector<2x128xf32>
    %79 = math.exp %78 : vector<2x128xf32>
    %80 = vector.extract_strided_slice %79 {offsets = [0, 0], sizes = [2, 8], strides = [1, 1]} : vector<2x128xf32> to vector<2x8xf32>
    %cst_18 = arith.constant dense<0.000000e+00> : vector<2x128xf32>
    %81 = tpu.matmul %80, %69, %cst_18 {dimension_numbers = #tpu.dot_dimension_numbers<[1], [0], [0], [1], [0, 0, 1, 1], [], []>} : vector<2x8xf32>, vector<8x128xf32>, vector<2x128xf32> -> vector<2x128xf32>
    %82 = vector.broadcast %66 : vector<1x1xf32> to vector<2x1xf32>
    %83 = arith.addf %76, %82 : vector<2x1xf32>
    %84 = math.log %81 : vector<2x128xf32>
    %85 = vector.broadcast %83 : vector<2x1xf32> to vector<2x128xf32>
    %86 = arith.addf %85, %84 : vector<2x128xf32>
    %87 = arith.addf %86, %73 : vector<2x128xf32>
    %cst_19 = arith.constant 0.000000e+00 : f32
    %88 = vector.broadcast %cst_19 : f32 to vector<2x1xf32>
    %89 = arith.cmpf ogt, %74, %88 : vector<2x1xf32>
    %90 = vector.shape_cast %89 : vector<2x1xi1> to vector<2x1xi1>
    %91 = vector.broadcast %90 : vector<2x1xi1> to vector<2x128xi1>
    %92 = arith.select %91, %87, %72 : vector<2x128xi1>, vector<2x128xf32>
    %93 = vector.extract_strided_slice %13 {offsets = [4, 0], sizes = [2, 128], strides = [1, 1]} : vector<16x128xf32> to vector<2x128xf32>
    %94 = vector.extract_strided_slice %17 {offsets = [4, 0], sizes = [2, 1], strides = [1, 1]} : vector<16x1xf32> to vector<2x1xf32>
    %cst_20 = arith.constant dense<0xFF800000> : vector<2xf32>
    %95 = vector.multi_reduction <maximumf>, %92, %cst_20 [1] : vector<2x128xf32> to vector<2xf32>
    %96 = vector.shape_cast %95 : vector<2xf32> to vector<2x1xf32>
    %97 = vector.broadcast %96 : vector<2x1xf32> to vector<2x128xf32>
    %98 = arith.subf %92, %97 : vector<2x128xf32>
    %99 = math.exp %98 : vector<2x128xf32>
    %100 = vector.extract_strided_slice %99 {offsets = [0, 0], sizes = [2, 8], strides = [1, 1]} : vector<2x128xf32> to vector<2x8xf32>
    %cst_21 = arith.constant dense<0.000000e+00> : vector<2x128xf32>
    %101 = tpu.matmul %100, %69, %cst_21 {dimension_numbers = #tpu.dot_dimension_numbers<[1], [0], [0], [1], [0, 0, 1, 1], [], []>} : vector<2x8xf32>, vector<8x128xf32>, vector<2x128xf32> -> vector<2x128xf32>
    %102 = vector.broadcast %66 : vector<1x1xf32> to vector<2x1xf32>
    %103 = arith.addf %96, %102 : vector<2x1xf32>
    %104 = math.log %101 : vector<2x128xf32>
    %105 = vector.broadcast %103 : vector<2x1xf32> to vector<2x128xf32>
    %106 = arith.addf %105, %104 : vector<2x128xf32>
    %107 = arith.addf %106, %93 : vector<2x128xf32>
    %cst_22 = arith.constant 0.000000e+00 : f32
    %108 = vector.broadcast %cst_22 : f32 to vector<2x1xf32>
    %109 = arith.cmpf ogt, %94, %108 : vector<2x1xf32>
    %110 = vector.shape_cast %109 : vector<2x1xi1> to vector<2x1xi1>
    %111 = vector.broadcast %110 : vector<2x1xi1> to vector<2x128xi1>
    %112 = arith.select %111, %107, %92 : vector<2x128xi1>, vector<2x128xf32>
    %113 = vector.extract_strided_slice %13 {offsets = [6, 0], sizes = [2, 128], strides = [1, 1]} : vector<16x128xf32> to vector<2x128xf32>
    %114 = vector.extract_strided_slice %17 {offsets = [6, 0], sizes = [2, 1], strides = [1, 1]} : vector<16x1xf32> to vector<2x1xf32>
    %cst_23 = arith.constant dense<0xFF800000> : vector<2xf32>
    %115 = vector.multi_reduction <maximumf>, %112, %cst_23 [1] : vector<2x128xf32> to vector<2xf32>
    %116 = vector.shape_cast %115 : vector<2xf32> to vector<2x1xf32>
    %117 = vector.broadcast %116 : vector<2x1xf32> to vector<2x128xf32>
    %118 = arith.subf %112, %117 : vector<2x128xf32>
    %119 = math.exp %118 : vector<2x128xf32>
    %120 = vector.extract_strided_slice %119 {offsets = [0, 0], sizes = [2, 8], strides = [1, 1]} : vector<2x128xf32> to vector<2x8xf32>
    %cst_24 = arith.constant dense<0.000000e+00> : vector<2x128xf32>
    %121 = tpu.matmul %120, %69, %cst_24 {dimension_numbers = #tpu.dot_dimension_numbers<[1], [0], [0], [1], [0, 0, 1, 1], [], []>} : vector<2x8xf32>, vector<8x128xf32>, vector<2x128xf32> -> vector<2x128xf32>
    %122 = vector.broadcast %66 : vector<1x1xf32> to vector<2x1xf32>
    %123 = arith.addf %116, %122 : vector<2x1xf32>
    %124 = math.log %121 : vector<2x128xf32>
    %125 = vector.broadcast %123 : vector<2x1xf32> to vector<2x128xf32>
    %126 = arith.addf %125, %124 : vector<2x128xf32>
    %127 = arith.addf %126, %113 : vector<2x128xf32>
    %cst_25 = arith.constant 0.000000e+00 : f32
    %128 = vector.broadcast %cst_25 : f32 to vector<2x1xf32>
    %129 = arith.cmpf ogt, %114, %128 : vector<2x1xf32>
    %130 = vector.shape_cast %129 : vector<2x1xi1> to vector<2x1xi1>
    %131 = vector.broadcast %130 : vector<2x1xi1> to vector<2x128xi1>
    %132 = arith.select %131, %127, %112 : vector<2x128xi1>, vector<2x128xf32>
    %133 = vector.extract_strided_slice %13 {offsets = [8, 0], sizes = [2, 128], strides = [1, 1]} : vector<16x128xf32> to vector<2x128xf32>
    %134 = vector.extract_strided_slice %17 {offsets = [8, 0], sizes = [2, 1], strides = [1, 1]} : vector<16x1xf32> to vector<2x1xf32>
    %cst_26 = arith.constant dense<0xFF800000> : vector<2xf32>
    %135 = vector.multi_reduction <maximumf>, %132, %cst_26 [1] : vector<2x128xf32> to vector<2xf32>
    %136 = vector.shape_cast %135 : vector<2xf32> to vector<2x1xf32>
    %137 = vector.broadcast %136 : vector<2x1xf32> to vector<2x128xf32>
    %138 = arith.subf %132, %137 : vector<2x128xf32>
    %139 = math.exp %138 : vector<2x128xf32>
    %140 = vector.extract_strided_slice %139 {offsets = [0, 0], sizes = [2, 8], strides = [1, 1]} : vector<2x128xf32> to vector<2x8xf32>
    %cst_27 = arith.constant dense<0.000000e+00> : vector<2x128xf32>
    %141 = tpu.matmul %140, %69, %cst_27 {dimension_numbers = #tpu.dot_dimension_numbers<[1], [0], [0], [1], [0, 0, 1, 1], [], []>} : vector<2x8xf32>, vector<8x128xf32>, vector<2x128xf32> -> vector<2x128xf32>
    %142 = vector.broadcast %66 : vector<1x1xf32> to vector<2x1xf32>
    %143 = arith.addf %136, %142 : vector<2x1xf32>
    %144 = math.log %141 : vector<2x128xf32>
    %145 = vector.broadcast %143 : vector<2x1xf32> to vector<2x128xf32>
    %146 = arith.addf %145, %144 : vector<2x128xf32>
    %147 = arith.addf %146, %133 : vector<2x128xf32>
    %cst_28 = arith.constant 0.000000e+00 : f32
    %148 = vector.broadcast %cst_28 : f32 to vector<2x1xf32>
    %149 = arith.cmpf ogt, %134, %148 : vector<2x1xf32>
    %150 = vector.shape_cast %149 : vector<2x1xi1> to vector<2x1xi1>
    %151 = vector.broadcast %150 : vector<2x1xi1> to vector<2x128xi1>
    %152 = arith.select %151, %147, %132 : vector<2x128xi1>, vector<2x128xf32>
    %153 = vector.extract_strided_slice %13 {offsets = [10, 0], sizes = [2, 128], strides = [1, 1]} : vector<16x128xf32> to vector<2x128xf32>
    %154 = vector.extract_strided_slice %17 {offsets = [10, 0], sizes = [2, 1], strides = [1, 1]} : vector<16x1xf32> to vector<2x1xf32>
    %cst_29 = arith.constant dense<0xFF800000> : vector<2xf32>
    %155 = vector.multi_reduction <maximumf>, %152, %cst_29 [1] : vector<2x128xf32> to vector<2xf32>
    %156 = vector.shape_cast %155 : vector<2xf32> to vector<2x1xf32>
    %157 = vector.broadcast %156 : vector<2x1xf32> to vector<2x128xf32>
    %158 = arith.subf %152, %157 : vector<2x128xf32>
    %159 = math.exp %158 : vector<2x128xf32>
    %160 = vector.extract_strided_slice %159 {offsets = [0, 0], sizes = [2, 8], strides = [1, 1]} : vector<2x128xf32> to vector<2x8xf32>
    %cst_30 = arith.constant dense<0.000000e+00> : vector<2x128xf32>
    %161 = tpu.matmul %160, %69, %cst_30 {dimension_numbers = #tpu.dot_dimension_numbers<[1], [0], [0], [1], [0, 0, 1, 1], [], []>} : vector<2x8xf32>, vector<8x128xf32>, vector<2x128xf32> -> vector<2x128xf32>
    %162 = vector.broadcast %66 : vector<1x1xf32> to vector<2x1xf32>
    %163 = arith.addf %156, %162 : vector<2x1xf32>
    %164 = math.log %161 : vector<2x128xf32>
    %165 = vector.broadcast %163 : vector<2x1xf32> to vector<2x128xf32>
    %166 = arith.addf %165, %164 : vector<2x128xf32>
    %167 = arith.addf %166, %153 : vector<2x128xf32>
    %cst_31 = arith.constant 0.000000e+00 : f32
    %168 = vector.broadcast %cst_31 : f32 to vector<2x1xf32>
    %169 = arith.cmpf ogt, %154, %168 : vector<2x1xf32>
    %170 = vector.shape_cast %169 : vector<2x1xi1> to vector<2x1xi1>
    %171 = vector.broadcast %170 : vector<2x1xi1> to vector<2x128xi1>
    %172 = arith.select %171, %167, %152 : vector<2x128xi1>, vector<2x128xf32>
    %173 = vector.extract_strided_slice %13 {offsets = [12, 0], sizes = [2, 128], strides = [1, 1]} : vector<16x128xf32> to vector<2x128xf32>
    %174 = vector.extract_strided_slice %17 {offsets = [12, 0], sizes = [2, 1], strides = [1, 1]} : vector<16x1xf32> to vector<2x1xf32>
    %cst_32 = arith.constant dense<0xFF800000> : vector<2xf32>
    %175 = vector.multi_reduction <maximumf>, %172, %cst_32 [1] : vector<2x128xf32> to vector<2xf32>
    %176 = vector.shape_cast %175 : vector<2xf32> to vector<2x1xf32>
    %177 = vector.broadcast %176 : vector<2x1xf32> to vector<2x128xf32>
    %178 = arith.subf %172, %177 : vector<2x128xf32>
    %179 = math.exp %178 : vector<2x128xf32>
    %180 = vector.extract_strided_slice %179 {offsets = [0, 0], sizes = [2, 8], strides = [1, 1]} : vector<2x128xf32> to vector<2x8xf32>
    %cst_33 = arith.constant dense<0.000000e+00> : vector<2x128xf32>
    %181 = tpu.matmul %180, %69, %cst_33 {dimension_numbers = #tpu.dot_dimension_numbers<[1], [0], [0], [1], [0, 0, 1, 1], [], []>} : vector<2x8xf32>, vector<8x128xf32>, vector<2x128xf32> -> vector<2x128xf32>
    %182 = vector.broadcast %66 : vector<1x1xf32> to vector<2x1xf32>
    %183 = arith.addf %176, %182 : vector<2x1xf32>
    %184 = math.log %181 : vector<2x128xf32>
    %185 = vector.broadcast %183 : vector<2x1xf32> to vector<2x128xf32>
    %186 = arith.addf %185, %184 : vector<2x128xf32>
    %187 = arith.addf %186, %173 : vector<2x128xf32>
    %cst_34 = arith.constant 0.000000e+00 : f32
    %188 = vector.broadcast %cst_34 : f32 to vector<2x1xf32>
    %189 = arith.cmpf ogt, %174, %188 : vector<2x1xf32>
    %190 = vector.shape_cast %189 : vector<2x1xi1> to vector<2x1xi1>
    %191 = vector.broadcast %190 : vector<2x1xi1> to vector<2x128xi1>
    %192 = arith.select %191, %187, %172 : vector<2x128xi1>, vector<2x128xf32>
    %193 = vector.extract_strided_slice %13 {offsets = [14, 0], sizes = [2, 128], strides = [1, 1]} : vector<16x128xf32> to vector<2x128xf32>
    %194 = vector.extract_strided_slice %17 {offsets = [14, 0], sizes = [2, 1], strides = [1, 1]} : vector<16x1xf32> to vector<2x1xf32>
    %cst_35 = arith.constant dense<0xFF800000> : vector<2xf32>
    %195 = vector.multi_reduction <maximumf>, %192, %cst_35 [1] : vector<2x128xf32> to vector<2xf32>
    %196 = vector.shape_cast %195 : vector<2xf32> to vector<2x1xf32>
    %197 = vector.broadcast %196 : vector<2x1xf32> to vector<2x128xf32>
    %198 = arith.subf %192, %197 : vector<2x128xf32>
    %199 = math.exp %198 : vector<2x128xf32>
    %200 = vector.extract_strided_slice %199 {offsets = [0, 0], sizes = [2, 8], strides = [1, 1]} : vector<2x128xf32> to vector<2x8xf32>
    %cst_36 = arith.constant dense<0.000000e+00> : vector<2x128xf32>
    %201 = tpu.matmul %200, %69, %cst_36 {dimension_numbers = #tpu.dot_dimension_numbers<[1], [0], [0], [1], [0, 0, 1, 1], [], []>} : vector<2x8xf32>, vector<8x128xf32>, vector<2x128xf32> -> vector<2x128xf32>
    %202 = vector.broadcast %66 : vector<1x1xf32> to vector<2x1xf32>
    %203 = arith.addf %196, %202 : vector<2x1xf32>
    %204 = math.log %201 : vector<2x128xf32>
    %205 = vector.broadcast %203 : vector<2x1xf32> to vector<2x128xf32>
    %206 = arith.addf %205, %204 : vector<2x128xf32>
    %207 = arith.addf %206, %193 : vector<2x128xf32>
    %cst_37 = arith.constant 0.000000e+00 : f32
    %208 = vector.broadcast %cst_37 : f32 to vector<2x1xf32>
    %209 = arith.cmpf ogt, %194, %208 : vector<2x1xf32>
    %210 = vector.shape_cast %209 : vector<2x1xi1> to vector<2x1xi1>
    %211 = vector.broadcast %210 : vector<2x1xi1> to vector<2x128xi1>
    %212 = arith.select %211, %207, %192 : vector<2x128xi1>, vector<2x128xf32>
    %213 = vector.broadcast %7 : vector<1x128xf32> to vector<2x128xf32>
    %214 = arith.addf %212, %213 : vector<2x128xf32>
    %cst_38 = arith.constant dense<0xFF800000> : vector<2xf32>
    %215 = vector.multi_reduction <maximumf>, %214, %cst_38 [1] : vector<2x128xf32> to vector<2xf32>
    %216 = vector.shape_cast %215 : vector<2xf32> to vector<2x1xf32>
    %217 = vector.broadcast %216 : vector<2x1xf32> to vector<2x128xf32>
    %218 = arith.subf %214, %217 : vector<2x128xf32>
    %219 = math.exp %218 : vector<2x128xf32>
    %cst_39 = arith.constant dense<0.000000e+00> : vector<2xf32>
    %220 = vector.multi_reduction <add>, %219, %cst_39 [1] : vector<2x128xf32> to vector<2xf32>
    %221 = vector.shape_cast %220 : vector<2xf32> to vector<2x1xf32>
    %222 = math.log %221 : vector<2x1xf32>
    %223 = arith.addf %216, %222 : vector<2x1xf32>
    %cst_40 = arith.constant dense<0.000000e+00> : vector<1xf32>
    %224 = vector.multi_reduction <add>, %223, %cst_40 [0] : vector<2x1xf32> to vector<1xf32>
    %225 = vector.shape_cast %224 : vector<1xf32> to vector<1x1xf32>
    %226 = arith.subf %225, %62 : vector<1x1xf32>
    %c0_41 = arith.constant 0 : index
    %c0_42 = arith.constant 0 : index
    %227 = vector.load %arg3[%c0_41, %c0_42] : memref<1x1xf32, #tpu.memory_space<vmem>>, vector<1x1xf32>
    tpu.vector_store %arg3[%c0_41, %c0_42], %226 {strides = array<i32>} : memref<1x1xf32, #tpu.memory_space<vmem>>, vector<1x1xf32>,
    return
  }
}

</mosaic_0001>

<llo_original>
// kernel: loss_fn.1
$region0: #{loss_fn.1}
  #allocation0 [shape = 'u32[]', space=smem, size = 0x4, offset = 0x4, fixed_abs, tag = 'smem constant byte address 0x4 - core index']
  #allocation1 [shape = 'u32[72,128]{1,0:T(1,128)}', space=vmem, size = 0x9000, scoped, tag = 'internal scratch']
  %s0 = inlined_call_operand.vmem [shape: s32[16,2], index: 0, kind: input, shape index: {}]
  %s1 = inlined_call_operand.hbm [shape: f32[64,128], index: 1, kind: input, shape index: {}]
  %s2 = inlined_call_operand.vmem [shape: f32[16,128], index: 2, kind: input, shape index: {}]
  %s3 = inlined_call_operand.hbm [shape: f32[1,1], index: 3, kind: output, shape index: {}]
  %s4 = sld [smem:[#allocation0]]
  $region26: #{loss_fn.1} parent=0
    _
  %s6 = ssub.s32 1, %s4
  %s7 = scalar_select 0, %s6, %s4
  $region1: #{loss_fn.1} parent=0
    #allocation2 [shape = 'u8[32768]{0}', space=vmem, size = 0x8000, scoped, tag = 'input window, operand 1, single buffered']
    #allocation3 [shape = 's32[1]{0}', space=sflag, size = 0x4, scoped, tag = 'scoped memory for loss_fn.1']
    #allocation4 [shape = 's32[1]{0}', space=sflag, size = 0x4, scoped, tag = 'scoped memory for loss_fn.1']
    #allocation5 [shape = 'u8[512]{0}', space=vmem, size = 0x400, scoped, tag = 'output window, operand 0, single buffered']
    %8 = vsyncpa [#allocation3], 0
    %9 = vsyncpa [#allocation4], 0
    // Predicated region
    $region2: #{loss_fn.1} parent=1 // pred_check
      _
    $region3: #{loss_fn.1} parent=1 // pred_check_branch
      %11 = sbr.rel (0) target = $region5
    $region4: #{loss_fn.1} parent=1 // pred_region
      _
    $region5: #{loss_fn.1} parent=1 // pred_fallthru
      _
    // Predicated region
    $region6: #{loss_fn.1} parent=1 // pred_check
      _
    $region7: #{loss_fn.1} parent=1 // pred_check_branch
      %13 = sbr.rel (0) target = $region9
    $region8: #{loss_fn.1} parent=1 // pred_region
      %15 = vsyncadd [#allocation3], 0
      %s16 = sshll.u32 %s1, 4
      %s17 = int_to_ptr.hbm [resolvable:$true] %s16
      %s18 = sshll.u32 [#allocation2], 4
      %s19 = int_to_ptr.vmem [resolvable:$true] %s18
      %24 = dma.hbm_to_vmem [thread:$0]  %s17, 1024, %s19, [#allocation3], 128, 128, 8
    $region9: #{loss_fn.1} parent=1 // pred_fallthru
      _
    // Predicated region
    $region10: #{loss_fn.1} parent=1 // pred_check
      _
    $region11: #{loss_fn.1} parent=1 // pred_check_branch
      %26 = sbr.rel (0) target = $region13
    $region12: #{loss_fn.1} parent=1 // pred_region
      _
    $region13: #{loss_fn.1} parent=1 // pred_fallthru
      _
    // Predicated region
    $region14: #{loss_fn.1} parent=1 // pred_check
      _
    $region15: #{loss_fn.1} parent=1 // pred_check_branch
      %28 = sbr.rel (0) target = $region17
    $region16: #{loss_fn.1} parent=1 // pred_region
      %30 = dma.done [#allocation3], 1024
    $region17: #{loss_fn.1} parent=1 // pred_fallthru
      _
    %v31 = vld [vmem:[%s0] sm:$0xff]
    %v32 = vld [vmem:[%s0 + $0x8] sm:$0xff]
    %v33 = vld [vmem:[#allocation2] sm:$0xff]
    %v34 = vld [vmem:[#allocation2 + $0x8] sm:$0xff]
    %v35 = vld [vmem:[#allocation2 + $0x10] sm:$0xff]
    %v36 = vld [vmem:[#allocation2 + $0x18] sm:$0xff]
    %v37 = vld [vmem:[#allocation2 + $0x20] sm:$0xff]
    %v38 = vld [vmem:[#allocation2 + $0x28] sm:$0xff]
    %v39 = vld [vmem:[#allocation2 + $0x30] sm:$0xff]
    %v40 = vld [vmem:[#allocation2 + $0x38] sm:$0xff]
    %v41 = vld [vmem:[%s2] sm:$0xff]
    %v42 = vld [vmem:[%s2 + $0x8] sm:$0xff]
    %v43 = vlaneseq
    %v44 = vand.u32 %v43, 127
    %45 = vset.pattern.permute.xlu0 0
    %46 = vperm.xlu0 %45, %v31
    %v47 = vpop.permute.xlu0 %46
    %48 = vset.pattern.permute.xlu0 0
    %49 = vperm.xlu0 %48, %v32
    %v50 = vpop.permute.xlu0 %49
    %vm51 = vcmp.eq.s32.totalorder %v47, %v44
    %vm52 = vcmp.eq.s32.totalorder %v50, %v44
    %v53 = vsel %vm51, 1, 0
    %v54 = vsel %vm52, 1, 0
    %v55 = vcvt.s32.f32 %v53
    %v56 = vcvt.s32.f32 %v54
    %vm57 = vcmask 523264
    %v59 = vsel %vm57, %v55, 0
    %v62 = vsel %vm57, %v56, 0
    %64 = vmatpush.msra.mxu0 0.0
    %65 = vmatpush.msra.mxu0 0.0
    %66 = vmatpush.msra.mxu0 0.0
    %67 = vmatpush.msra.mxu0 0.0
    %68 = vmatpush.msra.mxu0 0.0
    %69 = vmatpush.msra.mxu0 0.0
    %70 = vmatpush.msra.mxu0 0.0
    %71 = vmatpush.msra.mxu0 0.0
    %v72 = vand.u32 %v40, 4294901760
    %73 = vmatpush.msra.mxu0 %v72
    %v74 = vand.u32 %v39, 4294901760
    %75 = vmatpush.msra.mxu0 %v74
    %v76 = vand.u32 %v38, 4294901760
    %77 = vmatpush.msra.mxu0 %v76
    %v78 = vand.u32 %v37, 4294901760
    %79 = vmatpush.msra.mxu0 %v78
    %v80 = vand.u32 %v36, 4294901760
    %81 = vmatpush.msra.mxu0 %v80
    %v82 = vand.u32 %v35, 4294901760
    %83 = vmatpush.msra.mxu0 %v82
    %v84 = vand.u32 %v34, 4294901760
    %85 = vmatpush.msra.mxu0 %v84
    %v86 = vand.u32 %v33, 4294901760
    %87 = vmatpush.msra.mxu0 %v86
    %v88 = vand.u32 %v59, 4294901760
    %v89 = vsub.f32 %v59, %v88
    %v90 = vand.u32 %v89, 4294901760
    %v91 = vsub.f32 %v89, %v90
    %v92 = vand.u32 %v91, 4294901760
    %93 = vmatmul.f32.gmra.mxu0 %v92
    %v94 = vpop.f32.mrf.mxu0
    %v95 = vadd.f32 0.0, %v94
    %v96 = vand.u32 %v62, 4294901760
    %v97 = vsub.f32 %v62, %v96
    %v98 = vand.u32 %v97, 4294901760
    %v99 = vsub.f32 %v97, %v98
    %v100 = vand.u32 %v99, 4294901760
    %101 = vmatmul.f32.gmra.mxu0 %v100
    %v102 = vpop.f32.mrf.mxu0
    %v103 = vadd.f32 0.0, %v102
    %104 = vdwg.mxu0
    %105 = vmatpush.msra.mxu0 0.0
    %106 = vmatpush.msra.mxu0 0.0
    %107 = vmatpush.msra.mxu0 0.0
    %108 = vmatpush.msra.mxu0 0.0
    %109 = vmatpush.msra.mxu0 0.0
    %110 = vmatpush.msra.mxu0 0.0
    %111 = vmatpush.msra.mxu0 0.0
    %112 = vmatpush.msra.mxu0 0.0
    %v113 = vand.u32 %v40, 4294901760
    %v114 = vsub.f32 %v40, %v113
    %v115 = vand.u32 %v114, 4294901760
    %v116 = vsub.f32 %v114, %v115
    %v117 = vand.u32 %v116, 4294901760
    %118 = vmatpush.msra.mxu0 %v117
    %v119 = vand.u32 %v39, 4294901760
    %v120 = vsub.f32 %v39, %v119
    %v121 = vand.u32 %v120, 4294901760
    %v122 = vsub.f32 %v120, %v121
    %v123 = vand.u32 %v122, 4294901760
    %124 = vmatpush.msra.mxu0 %v123
    %v125 = vand.u32 %v38, 4294901760
    %v126 = vsub.f32 %v38, %v125
    %v127 = vand.u32 %v126, 4294901760
    %v128 = vsub.f32 %v126, %v127
    %v129 = vand.u32 %v128, 4294901760
    %130 = vmatpush.msra.mxu0 %v129
    %v131 = vand.u32 %v37, 4294901760
    %v132 = vsub.f32 %v37, %v131
    %v133 = vand.u32 %v132, 4294901760
    %v134 = vsub.f32 %v132, %v133
    %v135 = vand.u32 %v134, 4294901760
    %136 = vmatpush.msra.mxu0 %v135
    %v137 = vand.u32 %v36, 4294901760
    %v138 = vsub.f32 %v36, %v137
    %v139 = vand.u32 %v138, 4294901760
    %v140 = vsub.f32 %v138, %v139
    %v141 = vand.u32 %v140, 4294901760
    %142 = vmatpush.msra.mxu0 %v141
    %v143 = vand.u32 %v35, 4294901760
    %v144 = vsub.f32 %v35, %v143
    %v145 = vand.u32 %v144, 4294901760
    %v146 = vsub.f32 %v144, %v145
    %v147 = vand.u32 %v146, 4294901760
    %148 = vmatpush.msra.mxu0 %v147
    %v149 = vand.u32 %v34, 4294901760
    %v150 = vsub.f32 %v34, %v149
    %v151 = vand.u32 %v150, 4294901760
    %v152 = vsub.f32 %v150, %v151
    %v153 = vand.u32 %v152, 4294901760
    %154 = vmatpush.msra.mxu0 %v153
    %v155 = vand.u32 %v33, 4294901760
    %v156 = vsub.f32 %v33, %v155
    %v157 = vand.u32 %v156, 4294901760
    %v158 = vsub.f32 %v156, %v157
    %v159 = vand.u32 %v158, 4294901760
    %160 = vmatpush.msra.mxu0 %v159
    %v161 = vand.u32 %v59, 4294901760
    %162 = vmatmul.f32.gmra.mxu0 %v161
    %v163 = vpop.f32.mrf.mxu0
    %v164 = vadd.f32 %v95, %v163
    %v165 = vand.u32 %v62, 4294901760
    %166 = vmatmul.f32.gmra.mxu0 %v165
    %v167 = vpop.f32.mrf.mxu0
    %v168 = vadd.f32 %v103, %v167
    %169 = vdwg.mxu0
    %170 = vmatpush.msra.mxu0 0.0
    %171 = vmatpush.msra.mxu0 0.0
    %172 = vmatpush.msra.mxu0 0.0
    %173 = vmatpush.msra.mxu0 0.0
    %174 = vmatpush.msra.mxu0 0.0
    %175 = vmatpush.msra.mxu0 0.0
    %176 = vmatpush.msra.mxu0 0.0
    %177 = vmatpush.msra.mxu0 0.0
    %v178 = vand.u32 %v40, 4294901760
    %v179 = vsub.f32 %v40, %v178
    %180 = vmatpush.msra.mxu0 %v179
    %v181 = vand.u32 %v39, 4294901760
    %v182 = vsub.f32 %v39, %v181
    %183 = vmatpush.msra.mxu0 %v182
    %v184 = vand.u32 %v38, 4294901760
    %v185 = vsub.f32 %v38, %v184
    %186 = vmatpush.msra.mxu0 %v185
    %v187 = vand.u32 %v37, 4294901760
    %v188 = vsub.f32 %v37, %v187
    %189 = vmatpush.msra.mxu0 %v188
    %v190 = vand.u32 %v36, 4294901760
    %v191 = vsub.f32 %v36, %v190
    %192 = vmatpush.msra.mxu0 %v191
    %v193 = vand.u32 %v35, 4294901760
    %v194 = vsub.f32 %v35, %v193
    %195 = vmatpush.msra.mxu0 %v194
    %v196 = vand.u32 %v34, 4294901760
    %v197 = vsub.f32 %v34, %v196
    %198 = vmatpush.msra.mxu0 %v197
    %v199 = vand.u32 %v33, 4294901760
    %v200 = vsub.f32 %v33, %v199
    %201 = vmatpush.msra.mxu0 %v200
    %v202 = vand.u32 %v59, 4294901760
    %v203 = vsub.f32 %v59, %v202
    %204 = vmatmul.f32.gmra.mxu0 %v203
    %v205 = vpop.f32.mrf.mxu0
    %v206 = vadd.f32 %v164, %v205
    %v207 = vand.u32 %v62, 4294901760
    %v208 = vsub.f32 %v62, %v207
    %209 = vmatmul.f32.gmra.mxu0 %v208
    %v210 = vpop.f32.mrf.mxu0
    %v211 = vadd.f32 %v168, %v210
    %212 = vdwg.mxu0
    %213 = vmatpush.msra.mxu0 0.0
    %214 = vmatpush.msra.mxu0 0.0
    %215 = vmatpush.msra.mxu0 0.0
    %216 = vmatpush.msra.mxu0 0.0
    %217 = vmatpush.msra.mxu0 0.0
    %218 = vmatpush.msra.mxu0 0.0
    %219 = vmatpush.msra.mxu0 0.0
    %220 = vmatpush.msra.mxu0 0.0
    %v221 = vand.u32 %v40, 4294901760
    %222 = vmatpush.msra.mxu0 %v221
    %v223 = vand.u32 %v39, 4294901760
    %224 = vmatpush.msra.mxu0 %v223
    %v225 = vand.u32 %v38, 4294901760
    %226 = vmatpush.msra.mxu0 %v225
    %v227 = vand.u32 %v37, 4294901760
    %228 = vmatpush.msra.mxu0 %v227
    %v229 = vand.u32 %v36, 4294901760
    %230 = vmatpush.msra.mxu0 %v229
    %v231 = vand.u32 %v35, 4294901760
    %232 = vmatpush.msra.mxu0 %v231
    %v233 = vand.u32 %v34, 4294901760
    %234 = vmatpush.msra.mxu0 %v233
    %v235 = vand.u32 %v33, 4294901760
    %236 = vmatpush.msra.mxu0 %v235
    %v237 = vand.u32 %v59, 4294901760
    %v238 = vsub.f32 %v59, %v237
    %v239 = vand.u32 %v238, 4294901760
    %240 = vmatmul.f32.gmra.mxu0 %v239
    %v241 = vpop.f32.mrf.mxu0
    %v242 = vadd.f32 %v206, %v241
    %v243 = vand.u32 %v62, 4294901760
    %v244 = vsub.f32 %v62, %v243
    %v245 = vand.u32 %v244, 4294901760
    %246 = vmatmul.f32.gmra.mxu0 %v245
    %v247 = vpop.f32.mrf.mxu0
    %v248 = vadd.f32 %v211, %v247
    %249 = vdwg.mxu0
    %250 = vmatpush.msra.mxu0 0.0
    %251 = vmatpush.msra.mxu0 0.0
    %252 = vmatpush.msra.mxu0 0.0
    %253 = vmatpush.msra.mxu0 0.0
    %254 = vmatpush.msra.mxu0 0.0
    %255 = vmatpush.msra.mxu0 0.0
    %256 = vmatpush.msra.mxu0 0.0
    %257 = vmatpush.msra.mxu0 0.0
    %v258 = vand.u32 %v40, 4294901760
    %v259 = vsub.f32 %v40, %v258
    %v260 = vand.u32 %v259, 4294901760
    %261 = vmatpush.msra.mxu0 %v260
    %v262 = vand.u32 %v39, 4294901760
    %v263 = vsub.f32 %v39, %v262
    %v264 = vand.u32 %v263, 4294901760
    %265 = vmatpush.msra.mxu0 %v264
    %v266 = vand.u32 %v38, 4294901760
    %v267 = vsub.f32 %v38, %v266
    %v268 = vand.u32 %v267, 4294901760
    %269 = vmatpush.msra.mxu0 %v268
    %v270 = vand.u32 %v37, 4294901760
    %v271 = vsub.f32 %v37, %v270
    %v272 = vand.u32 %v271, 4294901760
    %273 = vmatpush.msra.mxu0 %v272
    %v274 = vand.u32 %v36, 4294901760
    %v275 = vsub.f32 %v36, %v274
    %v276 = vand.u32 %v275, 4294901760
    %277 = vmatpush.msra.mxu0 %v276
    %v278 = vand.u32 %v35, 4294901760
    %v279 = vsub.f32 %v35, %v278
    %v280 = vand.u32 %v279, 4294901760
    %281 = vmatpush.msra.mxu0 %v280
    %v282 = vand.u32 %v34, 4294901760
    %v283 = vsub.f32 %v34, %v282
    %v284 = vand.u32 %v283, 4294901760
    %285 = vmatpush.msra.mxu0 %v284
    %v286 = vand.u32 %v33, 4294901760
    %v287 = vsub.f32 %v33, %v286
    %v288 = vand.u32 %v287, 4294901760
    %289 = vmatpush.msra.mxu0 %v288
    %v290 = vand.u32 %v59, 4294901760
    %291 = vmatmul.f32.gmra.mxu0 %v290
    %v292 = vpop.f32.mrf.mxu0
    %v293 = vadd.f32 %v242, %v292
    %v294 = vand.u32 %v62, 4294901760
    %295 = vmatmul.f32.gmra.mxu0 %v294
    %v296 = vpop.f32.mrf.mxu0
    %v297 = vadd.f32 %v248, %v296
    %298 = vdwg.mxu0
    %299 = vmatpush.msra.mxu0 0.0
    %300 = vmatpush.msra.mxu0 0.0
    %301 = vmatpush.msra.mxu0 0.0
    %302 = vmatpush.msra.mxu0 0.0
    %303 = vmatpush.msra.mxu0 0.0
    %304 = vmatpush.msra.mxu0 0.0
    %305 = vmatpush.msra.mxu0 0.0
    %306 = vmatpush.msra.mxu0 0.0
    %v307 = vand.u32 %v40, 4294901760
    %308 = vmatpush.msra.mxu0 %v307
    %v309 = vand.u32 %v39, 4294901760
    %310 = vmatpush.msra.mxu0 %v309
    %v311 = vand.u32 %v38, 4294901760
    %312 = vmatpush.msra.mxu0 %v311
    %v313 = vand.u32 %v37, 4294901760
    %314 = vmatpush.msra.mxu0 %v313
    %v315 = vand.u32 %v36, 4294901760
    %316 = vmatpush.msra.mxu0 %v315
    %v317 = vand.u32 %v35, 4294901760
    %318 = vmatpush.msra.mxu0 %v317
    %v319 = vand.u32 %v34, 4294901760
    %320 = vmatpush.msra.mxu0 %v319
    %v321 = vand.u32 %v33, 4294901760
    %322 = vmatpush.msra.mxu0 %v321
    %v323 = vand.u32 %v59, 4294901760
    %324 = vmatmul.f32.gmra.mxu0 %v323
    %v325 = vpop.f32.mrf.mxu0
    %v326 = vadd.f32 %v293, %v325
    %v327 = vand.u32 %v62, 4294901760
    %328 = vmatmul.f32.gmra.mxu0 %v327
    %v329 = vpop.f32.mrf.mxu0
    %v330 = vadd.f32 %v297, %v329
    %331 = vdwg.mxu0
    %vm332 = vcmp.ne.s32.totalorder %v31, 0
    %vm333 = vcmp.ne.s32.totalorder %v32, 0
    %v334 = vsel %vm332, 1, 0
    %v335 = vsel %vm333, 1, 0
    %v336 = vcvt.s32.f32 %v334
    %v337 = vcvt.s32.f32 %v335
    %338 = vset.pattern.permute.xlu0 1
    %339 = vperm.xlu0 %338, %v31
    %v340 = vpop.permute.xlu0 %339
    %341 = vset.pattern.permute.xlu0 1
    %342 = vperm.xlu0 %341, %v32
    %v343 = vpop.permute.xlu0 %342
    %vm344 = vcmp.eq.s32.totalorder %v340, %v44
    %vm345 = vcmp.eq.s32.totalorder %v343, %v44
    %v346 = vsel %vm344, 1, 0
    %v347 = vsel %vm345, 1, 0
    %v348 = vcvt.s32.f32 %v346
    %v349 = vcvt.s32.f32 %v347
    %v350 = vmul.f32 %v326, %v348
    %v351 = vmul.f32 %v330, %v349
    %352 = vadd.xlane.f32.xlu0 %v350
    %v353 = vpop.xlane.xlu0 %352
    %354 = vadd.xlane.f32.xlu0 %v351
    %v355 = vpop.xlane.xlu0 %354
    %v356 = vmul.f32 %v353, %v336
    %v357 = vmul.f32 %v355, %v337
    %vm358 = vcmask 7168
    %v359 = vsel %vm358, %v356, 0.0
    %v360 = vsel %vm358, %v357, 0.0
    %v361 = vadd.f32 %v359, %v360
    %v362 = vrot.slane %v361, 4
    %v363 = vadd.f32 %v361, %v362
    %v364 = vrot.slane %v363, 2
    %v365 = vadd.f32 %v363, %v364
    %v366 = vrot.slane %v365, 1
    %v367 = vadd.f32 %v365, %v366
    %v368 = vperm.slane %v42, 0
    %v369 = vmul.f32 %v348, %v368
    %vm370 = vcmask 1041408
    %v371 = vsel %vm370, %v369, 0.0
    %372 = vadd.xlane.f32.xlu0 %v371
    %v373 = vpop.xlane.xlu0 %372
    %v374 = vsel %vm370, %v373, 0.0
    %v375 = vrot.slane %v374, 4
    %v376 = vadd.f32 %v374, %v375
    %v377 = vrot.slane %v376, 2
    %v378 = vadd.f32 %v376, %v377
    %v379 = vrot.slane %v378, 1
    %v380 = vadd.f32 %v378, %v379
    %vm381 = vcmask 64512
    %v383 = vsel %vm381, %v348, 0
    %v386 = vsel %vm381, %v349, 0
    %388 = vmatpush.msra.mxu0 0.0
    %389 = vmatpush.msra.mxu0 0.0
    %390 = vmatpush.msra.mxu0 0.0
    %391 = vmatpush.msra.mxu0 0.0
    %392 = vmatpush.msra.mxu0 0.0
    %393 = vmatpush.msra.mxu0 0.0
    %394 = vmatpush.msra.mxu0 0.0
    %395 = vmatpush.msra.mxu0 0.0
    %396 = vmatpush.msra.mxu0 0.0
    %397 = vmatpush.msra.mxu0 0.0
    %398 = vmatpush.msra.mxu0 0.0
    %399 = vmatpush.msra.mxu0 0.0
    %400 = vmatpush.msra.mxu0 0.0
    %401 = vmatpush.msra.mxu0 0.0
    %402 = vmatpush.msra.mxu0 0.0
    %403 = vmatpush.msra.mxu0 %v41
    %404 = vmatmul.f32.gmra.mxu0 %v383
    %v405 = vpop.f32.mrf.mxu0
    %v406 = vadd.f32 0.0, %v405
    %407 = vmatmul.f32.gmra.mxu0 %v386
    %v408 = vpop.f32.mrf.mxu0
    %v409 = vadd.f32 0.0, %v408
    %410 = vdwg.mxu0
    %vm411 = vcmask 1045504
    %v412 = vrot.slane %v348, 2
    %v413 = vrot.slane %v349, 2
    %v414 = vsel %vm411, %v412, %v413
    %v417 = vmul.f32 %v406, %v414
    %v418 = vmul.f32 %v409, %v413
    %419 = vadd.xlane.f32.xlu0 %v417
    %v420 = vpop.xlane.xlu0 %419
    %v421 = vsel %vm411, %v418, 0.0
    %422 = vadd.xlane.f32.xlu0 %v421
    %v423 = vpop.xlane.xlu0 %422
    %v426 = vrot.slane %v336, 2
    %v427 = vrot.slane %v337, 2
    %v428 = vsel %vm411, %v426, %v427
    %v431 = vmul.f32 %v420, %v428
    %v432 = vmul.f32 %v423, %v427
    %v433 = vsel %vm358, %v431, 0.0
    %vm434 = vcmask 5120
    %v435 = vsel %vm434, %v432, 0.0
    %v436 = vadd.f32 %v433, %v435
    %v437 = vrot.slane %v436, 4
    %v438 = vadd.f32 %v436, %v437
    %v439 = vrot.slane %v438, 2
    %v440 = vadd.f32 %v438, %v439
    %v441 = vrot.slane %v440, 1
    %v442 = vadd.f32 %v440, %v441
    %v443 = vperm.slane %v42, 1
    %v444 = vmul.f32 %v348, %v443
    %v445 = vmul.f32 %v349, %v443
    %446 = vadd.xlane.f32.xlu0 %v444
    %v447 = vpop.xlane.xlu0 %446
    %448 = vadd.xlane.f32.xlu0 %v445
    %v449 = vpop.xlane.xlu0 %448
    %v450 = vmul.f32 %v336, %v447
    %v451 = vmul.f32 %v337, %v449
    %v452 = vsel %vm358, %v450, 0.0
    %v453 = vsel %vm358, %v451, 0.0
    %v454 = vadd.f32 %v452, %v453
    %v455 = vrot.slane %v454, 4
    %v456 = vadd.f32 %v454, %v455
    %v457 = vrot.slane %v456, 2
    %v458 = vadd.f32 %v456, %v457
    %v459 = vrot.slane %v458, 1
    %v460 = vadd.f32 %v458, %v459
    %v463 = vrot.slane %v447, 6
    %v464 = vrot.slane %v449, 6
    %v465 = vsel %vm370, %v463, %v464
    %v468 = vmul.f32 %v336, %v463
    %v469 = vmul.f32 %v337, %v465
    %v472 = vrot.slane %v468, 2
    %v473 = vrot.slane %v469, 2
    %v474 = vsel %vm411, %v472, %v473
    %v477 = vsel %vm358, %v474, 0.0
    %v478 = vsel %vm434, %v473, 0.0
    %v479 = vadd.f32 %v477, %v478
    %v480 = vrot.slane %v479, 4
    %v481 = vadd.f32 %v479, %v480
    %v482 = vrot.slane %v481, 2
    %v483 = vadd.f32 %v481, %v482
    %v484 = vrot.slane %v483, 1
    %v485 = vadd.f32 %v483, %v484
    %v486 = vsub.f32 %v460, %v485
    %v487 = vadd.f32 %v367, %v380
    %v488 = vadd.f32 %v487, %v442
    %v489 = vadd.f32 %v488, %v486
    %490 = vmax.xlane.f32.xlu0 %v41
    %v491 = vpop.xlane.xlu0 %490
    %v492 = vrot.slane %v491, 4
    %v493 = vmax.f32 %v491, %v492
    %v494 = vrot.slane %v493, 2
    %v495 = vmax.f32 %v493, %v494
    %v496 = vrot.slane %v495, 1
    %v497 = vmax.f32 %v495, %v496
    %v498 = vsub.f32 %v41, %v497
    %v499 = vmul.f32 %v498, 1.442695
    %v500 = vpow.pop %v499
    %v501 = vadd.f32 %v368, %v326
    %v502 = vsel %vm370, %v501, -inf
    %503 = vmax.xlane.f32.xlu0 %v502
    %v504 = vpop.xlane.xlu0 %503
    %v505 = vsub.f32 %v501, %v504
    %v506 = vmul.f32 %v505, 1.442695
    %v507 = vpow.pop %v506
    %v509 = vsel %vm381, %v507, 0
    %511 = vmatpush.msra.mxu0 0.0
    %512 = vmatpush.msra.mxu0 0.0
    %513 = vmatpush.msra.mxu0 0.0
    %514 = vmatpush.msra.mxu0 0.0
    %515 = vmatpush.msra.mxu0 0.0
    %516 = vmatpush.msra.mxu0 0.0
    %517 = vmatpush.msra.mxu0 0.0
    %518 = vmatpush.msra.mxu0 0.0
    %519 = vmatpush.msra.mxu0 0.0
    %520 = vmatpush.msra.mxu0 0.0
    %521 = vmatpush.msra.mxu0 0.0
    %522 = vmatpush.msra.mxu0 0.0
    %523 = vmatpush.msra.mxu0 0.0
    %524 = vmatpush.msra.mxu0 0.0
    %525 = vmatpush.msra.mxu0 0.0
    %526 = vmatpush.msra.mxu0 %v500
    %527 = vmatmul.f32.gmra.mxu0 %v509
    %v528 = vpop.f32.mrf.mxu0
    %v529 = vadd.f32 0.0, %v528
    %530 = vdwg.mxu0
    %v531 = vadd.f32 %v504, %v497
    %v532 = vlog2.pop %v529
    %v533 = vmul.f32 %v532, 0.6931472
    %v534 = vadd.f32 %v531, %v533
    %v536 = vrot.slane %v326, 2
    %v538 = vadd.f32 %v534, %v536
    %vm539 = vcmp.gt.f32.partialorder %v336, 0.0
    %v540 = vsel %vm539, 1, 0
    %541 = vset.pattern.permute.xlu0 0
    %542 = vperm.xlu0 %541, %v540
    %v543 = vpop.permute.xlu0 %542
    %vm544 = vcmp.eq.s32.totalorder %v543, 1
    %v546 = vrot.slane %v538, 6
    %v549 = vrot.slane %v501, 6
    %v551 = vsel %vm544, %v546, %v549
    %vm552 = vcmask 1043458
    %v553 = vsel %vm552, %v551, -inf
    %554 = vmax.xlane.f32.xlu0 %v553
    %v555 = vpop.xlane.xlu0 %554
    %v556 = vsub.f32 %v551, %v555
    %v557 = vmul.f32 %v556, 1.442695
    %v558 = vpow.pop %v557
    %v560 = vrot.slane %v558, 2
    %v561 = vsel %vm381, %v560, 0
    %563 = vmatpush.msra.mxu0 0.0
    %564 = vmatpush.msra.mxu0 0.0
    %565 = vmatpush.msra.mxu0 0.0
    %566 = vmatpush.msra.mxu0 0.0
    %567 = vmatpush.msra.mxu0 0.0
    %568 = vmatpush.msra.mxu0 0.0
    %569 = vmatpush.msra.mxu0 0.0
    %570 = vmatpush.msra.mxu0 0.0
    %571 = vmatpush.msra.mxu0 0.0
    %572 = vmatpush.msra.mxu0 0.0
    %573 = vmatpush.msra.mxu0 0.0
    %574 = vmatpush.msra.mxu0 0.0
    %575 = vmatpush.msra.mxu0 0.0
    %576 = vmatpush.msra.mxu0 0.0
    %577 = vmatpush.msra.mxu0 0.0
    %578 = vmatpush.msra.mxu0 %v500
    %579 = vmatmul.f32.gmra.mxu0 %v561
    %v580 = vpop.f32.mrf.mxu0
    %v581 = vadd.f32 0.0, %v580
    %582 = vdwg.mxu0
    %v583 = vadd.f32 %v555, %v497
    %v584 = vlog2.pop %v581
    %v585 = vmul.f32 %v584, 0.6931472
    %v587 = vrot.slane %v585, 6
    %v589 = vadd.f32 %v583, %v587
    %v590 = vadd.f32 %v589, %v536
    %v592 = vrot.slane %v590, 6
    %v595 = vrot.slane %v551, 6
    %v597 = vsel %vm544, %v592, %v595
    %vm598 = vcmask 1045508
    %v599 = vsel %vm598, %v597, -inf
    %600 = vmax.xlane.f32.xlu0 %v599
    %v601 = vpop.xlane.xlu0 %600
    %v602 = vsub.f32 %v597, %v601
    %v603 = vmul.f32 %v602, 1.442695
    %v604 = vpow.pop %v603
    %v606 = vrot.slane %v604, 4
    %v607 = vsel %vm381, %v606, 0
    %609 = vmatpush.msra.mxu0 0.0
    %610 = vmatpush.msra.mxu0 0.0
    %611 = vmatpush.msra.mxu0 0.0
    %612 = vmatpush.msra.mxu0 0.0
    %613 = vmatpush.msra.mxu0 0.0
    %614 = vmatpush.msra.mxu0 0.0
    %615 = vmatpush.msra.mxu0 0.0
    %616 = vmatpush.msra.mxu0 0.0
    %617 = vmatpush.msra.mxu0 0.0
    %618 = vmatpush.msra.mxu0 0.0
    %619 = vmatpush.msra.mxu0 0.0
    %620 = vmatpush.msra.mxu0 0.0
    %621 = vmatpush.msra.mxu0 0.0
    %622 = vmatpush.msra.mxu0 0.0
    %623 = vmatpush.msra.mxu0 0.0
    %624 = vmatpush.msra.mxu0 %v500
    %625 = vmatmul.f32.gmra.mxu0 %v607
    %v626 = vpop.f32.mrf.mxu0
    %v627 = vadd.f32 0.0, %v626
    %628 = vdwg.mxu0
    %v629 = vadd.f32 %v601, %v497
    %v630 = vlog2.pop %v627
    %v631 = vmul.f32 %v630, 0.6931472
    %v633 = vrot.slane %v631, 4
    %v635 = vadd.f32 %v629, %v633
    %v636 = vadd.f32 %v635, %v536
    %v638 = vrot.slane %v636, 6
    %v641 = vrot.slane %v597, 6
    %v643 = vsel %vm544, %v638, %v641
    %vm644 = vcmask 1047558
    %v645 = vsel %vm644, %v643, -inf
    %646 = vmax.xlane.f32.xlu0 %v645
    %v647 = vpop.xlane.xlu0 %646
    %v648 = vsub.f32 %v643, %v647
    %v649 = vmul.f32 %v648, 1.442695
    %v650 = vpow.pop %v649
    %v652 = vrot.slane %v650, 6
    %v653 = vsel %vm381, %v652, 0
    %655 = vmatpush.msra.mxu0 0.0
    %656 = vmatpush.msra.mxu0 0.0
    %657 = vmatpush.msra.mxu0 0.0
    %658 = vmatpush.msra.mxu0 0.0
    %659 = vmatpush.msra.mxu0 0.0
    %660 = vmatpush.msra.mxu0 0.0
    %661 = vmatpush.msra.mxu0 0.0
    %662 = vmatpush.msra.mxu0 0.0
    %663 = vmatpush.msra.mxu0 0.0
    %664 = vmatpush.msra.mxu0 0.0
    %665 = vmatpush.msra.mxu0 0.0
    %666 = vmatpush.msra.mxu0 0.0
    %667 = vmatpush.msra.mxu0 0.0
    %668 = vmatpush.msra.mxu0 0.0
    %669 = vmatpush.msra.mxu0 0.0
    %670 = vmatpush.msra.mxu0 %v500
    %671 = vmatmul.f32.gmra.mxu0 %v653
    %v672 = vpop.f32.mrf.mxu0
    %v673 = vadd.f32 0.0, %v672
    %674 = vdwg.mxu0
    %v675 = vadd.f32 %v647, %v497
    %v676 = vlog2.pop %v673
    %v677 = vmul.f32 %v676, 0.6931472
    %v679 = vrot.slane %v677, 2
    %v681 = vadd.f32 %v675, %v679
    %v683 = vrot.slane %v330, 2
    %v685 = vadd.f32 %v681, %v683
    %vm686 = vcmp.gt.f32.partialorder %v337, 0.0
    %v687 = vsel %vm686, 1, 0
    %688 = vset.pattern.permute.xlu0 0
    %689 = vperm.xlu0 %688, %v687
    %v690 = vpop.permute.xlu0 %689
    %vm691 = vcmp.eq.s32.totalorder %v690, 1
    %v693 = vrot.slane %v685, 6
    %v696 = vrot.slane %v643, 6
    %v698 = vsel %vm691, %v693, %v696
    %v699 = vsel %vm370, %v698, -inf
    %700 = vmax.xlane.f32.xlu0 %v699
    %v701 = vpop.xlane.xlu0 %700
    %v702 = vsub.f32 %v698, %v701
    %v703 = vmul.f32 %v702, 1.442695
    %v704 = vpow.pop %v703
    %v706 = vsel %vm381, %v704, 0
    %708 = vmatpush.msra.mxu0 0.0
    %709 = vmatpush.msra.mxu0 0.0
    %710 = vmatpush.msra.mxu0 0.0
    %711 = vmatpush.msra.mxu0 0.0
    %712 = vmatpush.msra.mxu0 0.0
    %713 = vmatpush.msra.mxu0 0.0
    %714 = vmatpush.msra.mxu0 0.0
    %715 = vmatpush.msra.mxu0 0.0
    %716 = vmatpush.msra.mxu0 0.0
    %717 = vmatpush.msra.mxu0 0.0
    %718 = vmatpush.msra.mxu0 0.0
    %719 = vmatpush.msra.mxu0 0.0
    %720 = vmatpush.msra.mxu0 0.0
    %721 = vmatpush.msra.mxu0 0.0
    %722 = vmatpush.msra.mxu0 0.0
    %723 = vmatpush.msra.mxu0 %v500
    %724 = vmatmul.f32.gmra.mxu0 %v706
    %v725 = vpop.f32.mrf.mxu0
    %v726 = vadd.f32 0.0, %v725
    %727 = vdwg.mxu0
    %v728 = vadd.f32 %v701, %v497
    %v729 = vlog2.pop %v726
    %v730 = vmul.f32 %v729, 0.6931472
    %v731 = vadd.f32 %v728, %v730
    %v732 = vadd.f32 %v731, %v683
    %v734 = vrot.slane %v732, 6
    %v737 = vrot.slane %v698, 6
    %v739 = vsel %vm691, %v734, %v737
    %v740 = vsel %vm552, %v739, -inf
    %741 = vmax.xlane.f32.xlu0 %v740
    %v742 = vpop.xlane.xlu0 %741
    %v743 = vsub.f32 %v739, %v742
    %v744 = vmul.f32 %v743, 1.442695
    %v745 = vpow.pop %v744
    %v747 = vrot.slane %v745, 2
    %v748 = vsel %vm381, %v747, 0
    %750 = vmatpush.msra.mxu0 0.0
    %751 = vmatpush.msra.mxu0 0.0
    %752 = vmatpush.msra.mxu0 0.0
    %753 = vmatpush.msra.mxu0 0.0
    %754 = vmatpush.msra.mxu0 0.0
    %755 = vmatpush.msra.mxu0 0.0
    %756 = vmatpush.msra.mxu0 0.0
    %757 = vmatpush.msra.mxu0 0.0
    %758 = vmatpush.msra.mxu0 0.0
    %759 = vmatpush.msra.mxu0 0.0
    %760 = vmatpush.msra.mxu0 0.0
    %761 = vmatpush.msra.mxu0 0.0
    %762 = vmatpush.msra.mxu0 0.0
    %763 = vmatpush.msra.mxu0 0.0
    %764 = vmatpush.msra.mxu0 0.0
    %765 = vmatpush.msra.mxu0 %v500
    %766 = vmatmul.f32.gmra.mxu0 %v748
    %v767 = vpop.f32.mrf.mxu0
    %v768 = vadd.f32 0.0, %v767
    %769 = vdwg.mxu0
    %v770 = vadd.f32 %v742, %v497
    %v771 = vlog2.pop %v768
    %v772 = vmul.f32 %v771, 0.6931472
    %v774 = vrot.slane %v772, 6
    %v776 = vadd.f32 %v770, %v774
    %v777 = vadd.f32 %v776, %v683
    %v779 = vrot.slane %v777, 6
    %v782 = vrot.slane %v739, 6
    %v784 = vsel %vm691, %v779, %v782
    %v785 = vsel %vm598, %v784, -inf
    %786 = vmax.xlane.f32.xlu0 %v785
    %v787 = vpop.xlane.xlu0 %786
    %v788 = vsub.f32 %v784, %v787
    %v789 = vmul.f32 %v788, 1.442695
    %v790 = vpow.pop %v789
    %v792 = vrot.slane %v790, 4
    %v793 = vsel %vm381, %v792, 0
    %795 = vmatpush.msra.mxu0 0.0
    %796 = vmatpush.msra.mxu0 0.0
    %797 = vmatpush.msra.mxu0 0.0
    %798 = vmatpush.msra.mxu0 0.0
    %799 = vmatpush.msra.mxu0 0.0
    %800 = vmatpush.msra.mxu0 0.0
    %801 = vmatpush.msra.mxu0 0.0
    %802 = vmatpush.msra.mxu0 0.0
    %803 = vmatpush.msra.mxu0 0.0
    %804 = vmatpush.msra.mxu0 0.0
    %805 = vmatpush.msra.mxu0 0.0
    %806 = vmatpush.msra.mxu0 0.0
    %807 = vmatpush.msra.mxu0 0.0
    %808 = vmatpush.msra.mxu0 0.0
    %809 = vmatpush.msra.mxu0 0.0
    %810 = vmatpush.msra.mxu0 %v500
    %811 = vmatmul.f32.gmra.mxu0 %v793
    %v812 = vpop.f32.mrf.mxu0
    %v813 = vadd.f32 0.0, %v812
    %814 = vdwg.mxu0
    %v815 = vadd.f32 %v787, %v497
    %v816 = vlog2.pop %v813
    %v817 = vmul.f32 %v816, 0.6931472
    %v819 = vrot.slane %v817, 4
    %v821 = vadd.f32 %v815, %v819
    %v822 = vadd.f32 %v821, %v683
    %v824 = vrot.slane %v822, 6
    %v827 = vrot.slane %v784, 6
    %v829 = vsel %vm691, %v824, %v827
    %v830 = vadd.f32 %v829, %v443
    %v831 = vsel %vm644, %v830, -inf
    %832 = vmax.xlane.f32.xlu0 %v831
    %v833 = vpop.xlane.xlu0 %832
    %v834 = vsub.f32 %v830, %v833
    %v835 = vmul.f32 %v834, 1.442695
    %v836 = vpow.pop %v835
    %v837 = vsel %vm644, %v836, 0.0
    %838 = vadd.xlane.f32.xlu0 %v837
    %v839 = vpop.xlane.xlu0 %838
    %v840 = vlog2.pop %v839
    %v841 = vmul.f32 %v840, 0.6931472
    %v842 = vadd.f32 %v833, %v841
    %v844 = vrot.slane %v842, 6
    %v846 = vsel %vm370, %v844, 0.0
    %v847 = vrot.slane %v846, 4
    %v848 = vadd.f32 %v846, %v847
    %v849 = vrot.slane %v848, 2
    %v850 = vadd.f32 %v848, %v849
    %v851 = vrot.slane %v850, 1
    %v852 = vadd.f32 %v850, %v851
    %v853 = vsub.f32 %v852, %v489
    %vm854 = vcmask 0
    %855 = vst.msk [vmem:[#allocation5] sm:$0x1] %vm854, %v853
    // Predicated region
    $region18: #{loss_fn.1} parent=1 // pred_check
      _
    $region19: #{loss_fn.1} parent=1 // pred_check_branch
      %857 = sbr.rel (0) target = $region21
    $region20: #{loss_fn.1} parent=1 // pred_region
      %859 = vsyncadd [#allocation4], 0
      %s861 = sshll.u32 [#allocation5], 4
      %s862 = int_to_ptr.vmem [resolvable:$true] %s861
      %s863 = sshll.u32 %s3, 4
      %s864 = int_to_ptr.hbm [resolvable:$true] %s863
      %866 = dma.vmem_to_hbm [thread:$0]  %s862, 16, %s864, [#allocation4]
    $region21: #{loss_fn.1} parent=1 // pred_fallthru
      _
    // Predicated region
    $region22: #{loss_fn.1} parent=1 // pred_check
      _
    $region23: #{loss_fn.1} parent=1 // pred_check_branch
      %868 = sbr.rel (0) target = $region25
    $region24: #{loss_fn.1} parent=1 // pred_region
      %870 = dma.done [#allocation4], 16
    $region25: #{loss_fn.1} parent=1 // pred_fallthru
      _
    %871 = vsyncpa [#allocation3], 1
    %872 = vsyncpa [#allocation4], 1

</llo_original>
